<compile_context>
chip_gen: v6e
topology: v6e:2x2x1
jax: 0.10.0
libtpu: 0.0.40
codegen_flags: <defaults>
</compile_context>

<pallas_src>
import functools

import jax
import jax.numpy as jnp
from jax.experimental import pallas as pl
from jax.experimental.pallas import tpu as pltpu


def _round_up(x, m):
    return (x + m - 1) // m * m


def _tpu_chip_info():
    """Best-effort (vmem_capacity_bytes, tensorcores_per_chip)."""
    vmem_cap = 64 * 1024 * 1024        # conservative (v7x-sized) fallback
    num_tc = 1
    try:
        info = pltpu.get_tpu_info()
        cap = int(getattr(info, "vmem_capacity_bytes", 0) or 0)
        if cap > 0:
            vmem_cap = cap
        for attr in ("num_cores", "tensorcores_per_chip", "num_tensorcores", "core_count"):
            nc = getattr(info, attr, None)
            if nc:
                num_tc = int(nc)
                break
    except Exception:
        pass
    try:
        kind = jax.devices()[0].device_kind.lower()
        if ("v7" in kind) or ("7x" in kind):
            num_tc = max(num_tc, 2)    # v7x: 2 TensorCores per chip
        elif ("v5" in kind) or ("v6" in kind):
            num_tc = 1                 # single-TC chips: a 2-way split is pure overhead
    except Exception:
        pass
    return vmem_cap, num_tc


def moon_loss_kernel(fw_ref, labels_ref, z_ref, zg_ref, zp_ref,
                     nvalid_ref, params_ref, out_ref, acc_ref, *,
                     tiles_per_core):
    p = pl.program_id(0)          # per-core ("parallel") axis — size 1 off v7x
    i = pl.program_id(1)          # batch-tile reduction axis

    @pl.when(i == 0)
    def _init():
        acc_ref[...] = jnp.zeros_like(acc_ref)

    logits = fw_ref[...].astype(jnp.float32)             # (TB, C) — in-kernel upcast
    TB, C = logits.shape
    labels = labels_ref[...]                              # (TB, 1) int32

    # Mask rows beyond the true batch (ragged last block / clamped duplicate block).
    n_valid = nvalid_ref[0]
    row0 = (p * tiles_per_core + i) * TB
    row_idx = row0 + jax.lax.broadcasted_iota(jnp.int32, (TB, 1), 0)
    valid = row_idx < n_valid                              # (TB, 1) bool

    # ---- supervised cross-entropy (no one-hot materialization) ----
    class_iota = jax.lax.broadcasted_iota(jnp.int32, (TB, C), 1)
    m = jnp.max(logits, axis=-1, keepdims=True)
    lse = jnp.log(jnp.sum(jnp.exp(logits - m), axis=-1, keepdims=True)) + m
    tgt = jnp.sum(jnp.where(class_iota == labels, logits, 0.0),
                  axis=-1, keepdims=True)
    ce = lse - tgt                                         # (TB, 1)

    # ---- model-contrastive term ----
    # -log(e^{cos_g/t} / (e^{cos_g/t} + e^{cos_p/t})) == softplus((cos_p - cos_g)/t)
    z = z_ref[...].astype(jnp.float32)
    zg = zg_ref[...].astype(jnp.float32)
    zp = zp_ref[...].astype(jnp.float32)
    eps2 = jnp.float32(1e-16)                              # (1e-8)^2 clamp on ||a||^2*||b||^2

    z_sq = jnp.sum(z * z, axis=-1, keepdims=True)
    g_sq = jnp.sum(zg * zg, axis=-1, keepdims=True)
    p_sq = jnp.sum(zp * zp, axis=-1, keepdims=True)
    dot_g = jnp.sum(z * zg, axis=-1, keepdims=True)
    dot_p = jnp.sum(z * zp, axis=-1, keepdims=True)
    # TODO(synk): if a v7x bundle dump shows these lane reductions saturating the XLU
    # before HBM saturates, offload them to the idle MXU via dot-with-ones.

    cos_g = dot_g * jax.lax.rsqrt(jnp.maximum(z_sq * g_sq, eps2))
    cos_p = dot_p * jax.lax.rsqrt(jnp.maximum(z_sq * p_sq, eps2))

    inv_tau = params_ref[0]
    mue = params_ref[1]
    x = (cos_p - cos_g) * inv_tau
    # Overflow-safe softplus (exact same EUP op count as the naive form).
    con = jnp.maximum(x, 0.0) + jnp.log(1.0 + jnp.exp(-jnp.abs(x)))

    # Elementwise accumulate into VMEM (keep the mask a true select, never multiply-by-0).
    acc_ref[...] += jnp.where(valid, ce + mue * con, 0.0)

    @pl.when(i == pl.num_programs(1) - 1)
    def _finalize():
        out_ref[...] = jnp.sum(acc_ref[...]).reshape(1, 1, 1)


def moon_loss(Fw, labels, z, zglob, zprev, tau, mue, *,
              block_rows=None, fw_buffers=None):
    B, C = Fw.shape
    Bz, D = z.shape
    assert Bz == B and zglob.shape == (B, D) and zprev.shape == (B, D)

    labels2d = labels.astype(jnp.int32).reshape(B, 1)

    # --- chip-aware sizing (v5e/v6e: 128 MiB VMEM, 1 TC; v7x: 64 MiB, 2 TC) ---
    vmem_cap, num_tc = _tpu_chip_info()
    vmem_limit = max(32 << 20, min(vmem_cap - (16 << 20), (vmem_cap * 3) // 4))

    lane_c = _round_up(C, 128)
    lane_d = _round_up(D, 128)
    it_fw = Fw.dtype.itemsize
    it_z = z.dtype.itemsize

    # Bytes that actually stream from HBM per batch row.
    hbm_per_row = C * it_fw + 3 * D * it_z + 4
    # VMEM footprint per tile row (lane padded): double-buffered native-dtype input
    # tiles, f32 upcast copies + elementwise temporaries, padded labels buffer, and
    # the (TB,1) f32 accumulator scratch.
    vmem_per_row = (
        2 * (lane_c * it_fw + 3 * lane_d * it_z + 128 * 4)   # 2x-buffered input tiles
        + 4 * lane_c * 4                                      # f32 logits + (TB,C) temps
        + 5 * lane_d * 4                                      # f32 z/zg/zp + (TB,D) temps
        + 128 * 4                                             # (TB,1) accumulator
    )

    if B <= 8:
        TB = B                                   # full-array block (always legal)
    else:
        if block_rows is None:
            tb_vmem = (vmem_limit * 85 // 100) // max(vmem_per_row, 1)
            tb_hbm = (8 << 20) // max(hbm_per_row, 1)         # ~8 MiB HBM payload / step
            tb = min(tb_vmem, tb_hbm)
        else:
            tb = int(block_rows)
        tb = max(8, (tb // 8) * 8)               # sublane alignment
        TB = min(tb, (B // 8) * 8)               # never exceed the array extent

    tiles_total = pl.cdiv(B, TB)
    P = num_tc if (num_tc > 1 and tiles_total >= 2) else 1
    T = pl.cdiv(tiles_total, P)
    last_block = tiles_total - 1

    def row_map(pc, it):
        # Clamp so a duplicate trailing block (odd tile count on the v7x 2-core split)
        # never indexes past the array; its rows are masked out inside the kernel.
        return (jnp.minimum(pc * T + it, last_block), 0)

    fw_spec_kwargs = {}
    if fw_buffers is not None and int(fw_buffers) > 2:
        # Optional deeper buffering of the dominant stream; only worthwhile on
        # 128-MiB-VMEM chips (v5e/v6e) when profiling shows exposed DMA. Off by default.
        fw_spec_kwargs["pipeline_mode"] = pl.Buffered(int(fw_buffers))

    kernel = functools.partial(moon_loss_kernel, tiles_per_core=T)

    grid_spec = pltpu.PrefetchScalarGridSpec(
        num_scalar_prefetch=0,
        grid=(P, T),
        in_specs=[
            pl.BlockSpec((TB, C), row_map, **fw_spec_kwargs),      # Fw (native dtype)
            pl.BlockSpec((TB, 1), row_map),                        # labels
            pl.BlockSpec((TB, D), row_map),                        # z
            pl.BlockSpec((TB, D), row_map),                        # zglob
            pl.BlockSpec((TB, D), row_map),                        # zprev
            pl.BlockSpec(memory_space=pltpu.MemorySpace.SMEM),     # n_valid
            pl.BlockSpec(memory_space=pltpu.MemorySpace.SMEM),     # [1/tau, mue]
        ],
        out_specs=pl.BlockSpec((1, 1, 1), lambda pc, it: (pc, 0, 0)),
        scratch_shapes=[pltpu.VMEM((TB, 1), jnp.float32)],         # per-row accumulator
    )

    n_valid_a = jnp.full((1,), B, dtype=jnp.int32)
    params_a = jnp.stack([1.0 / jnp.asarray(tau, jnp.float32),
                          jnp.asarray(mue, jnp.float32)])

    partials = pl.pallas_call(
        kernel,
        grid_spec=grid_spec,
        out_shape=jax.ShapeDtypeStruct((P, 1, 1), jnp.float32),
        compiler_params=pltpu.CompilerParams(
            dimension_semantics=("parallel", "arbitrary"),
            vmem_limit_bytes=int(vmem_limit),
        ),
    )(Fw, labels2d, z, zglob, zprev, n_valid_a, params_a)

    # mean(CE) + mue * mean(contrastive) == sum(ce + mue*con) / B
    return jnp.sum(partials) / jnp.float32(B)


def moon_loss_ref(Fw, labels, z, zglob, zprev, tau, mue):
    """Pure-JAX reference with identical semantics (for verification)."""
    logp = jax.nn.log_softmax(Fw.astype(jnp.float32), axis=-1)
    ce = -jnp.take_along_axis(logp, labels[:, None].astype(jnp.int32), axis=-1)[:, 0]
    supervised = jnp.mean(ce)

    def cos(a, b):
        a = a.astype(jnp.float32)
        b = b.astype(jnp.float32)
        num = jnp.sum(a * b, axis=-1)
        den = jnp.maximum(jnp.linalg.norm(a, axis=-1) * jnp.linalg.norm(b, axis=-1), 1e-8)
        return num / den

    e1 = jnp.exp(cos(z, zglob) / tau)
    e2 = jnp.exp(cos(z, zprev) / tau)
    contrastive = -jnp.log(e1 / (e1 + e2))
    return jnp.mean(supervised + mue * contrastive)


if __name__ == "__main__":
    key = jax.random.PRNGKey(0)

    # ---- test 1: toy shapes, single tile, auto tile sizing ----
    B, C, D = 8, 10, 32
    tau, mue = 0.5, 1.0
    k1, k2, k3, k4, k5, key = jax.random.split(key, 6)
    Fw = jax.random.normal(k1, (B, C), dtype=jnp.float32)
    labels = jax.random.randint(k2, (B,), 0, C, dtype=jnp.int32)
    z = jax.random.normal(k3, (B, D), dtype=jnp.float32)
    zglob = jax.random.normal(k4, (B, D), dtype=jnp.float32)
    zprev = jax.random.normal(k5, (B, D), dtype=jnp.float32)

    loss = moon_loss(Fw, labels, z, zglob, zprev, tau, mue)
    jax.block_until_ready(loss)
    ref = moon_loss_ref(Fw, labels, z, zglob, zprev, tau, mue)
    assert jnp.allclose(loss, ref, rtol=1e-4, atol=1e-5), (loss, ref)

    # ---- test 2: ragged batch, multi-tile grid, (possible) 2-way core split, masking ----
    B2, C2, D2 = 300, 17, 48
    k1, k2, k3, k4, k5, key = jax.random.split(key, 6)
    Fw2 = jax.random.normal(k1, (B2, C2), dtype=jnp.float32)
    labels2 = jax.random.randint(k2, (B2,), 0, C2, dtype=jnp.int32)
    z2 = jax.random.normal(k3, (B2, D2), dtype=jnp.float32)
    zg2 = jax.random.normal(k4, (B2, D2), dtype=jnp.float32)
    zp2 = jax.random.normal(k5, (B2, D2), dtype=jnp.float32)

    loss2 = moon_loss(Fw2, labels2, z2, zg2, zp2, 0.7, 2.5, block_rows=64)
    jax.block_until_ready(loss2)
    ref2 = moon_loss_ref(Fw2, labels2, z2, zg2, zp2, 0.7, 2.5)
    assert jnp.allclose(loss2, ref2, rtol=1e-4, atol=1e-5), (loss2, ref2)

    # ---- test 3: same ragged batch with fully automatic tile sizing (single big tile) ----
    loss3 = moon_loss(Fw2, labels2, z2, zg2, zp2, 0.7, 2.5)
    jax.block_until_ready(loss3)
    assert jnp.allclose(loss3, ref2, rtol=1e-4, atol=1e-5), (loss3, ref2)

    print("KERNEL_OK")
</pallas_src>

<mosaic_0001>
module attributes {stable_mosaic.version = 11 : i64} {
  func.func @moon_loss_kernel(%arg0: i32, %arg1: i32, %arg2: memref<8x10xf32, #tpu.memory_space<vmem>>, %arg3: memref<8x1xi32, #tpu.memory_space<vmem>>, %arg4: memref<8x32xf32, #tpu.memory_space<vmem>>, %arg5: memref<8x32xf32, #tpu.memory_space<vmem>>, %arg6: memref<8x32xf32, #tpu.memory_space<vmem>>, %arg7: memref<1xi32, #tpu.memory_space<smem>>, %arg8: memref<2xf32, #tpu.memory_space<smem>>, %arg9: memref<1x1x1xf32, #tpu.memory_space<vmem>>, %arg10: memref<8x1xf32, #tpu.memory_space<vmem>>) attributes {dimension_semantics = [#tpu.dimension_semantics<parallel>, #tpu.dimension_semantics<arbitrary>], iteration_bounds = array<i64: 1, 1>, scalar_prefetch = 0 : i64, scratch_operands = 1 : i64, tpu.core_type = #tpu.core_type<tc>, window_params = [{transform_indices = @transform_0, window_bounds = array<i64: 8, 10>}, {transform_indices = @transform_1, window_bounds = array<i64: 8, 1>}, {transform_indices = @transform_2, window_bounds = array<i64: 8, 32>}, {transform_indices = @transform_3, window_bounds = array<i64: 8, 32>}, {transform_indices = @transform_4, window_bounds = array<i64: 8, 32>}, {transform_indices = @transform_5, window_bounds = array<i64: 1>}, {transform_indices = @transform_6, window_bounds = array<i64: 2>}, {transform_indices = @transform_7, window_bounds = array<i64: 1, 1, 1>}]} {
    %c0_i32 = arith.constant 0 : i32
    %0 = arith.cmpi eq, %arg1, %c0_i32 : i32
    %1 = arith.extui %0 : i1 to i32
    %c0_i32_0 = arith.constant 0 : i32
    %2 = arith.cmpi ne, %1, %c0_i32_0 : i32
    scf.if %2 {
      %cst_32 = arith.constant 0.000000e+00 : f32
      %85 = vector.broadcast %cst_32 : f32 to vector<8x1xf32>
      %c0_33 = arith.constant 0 : index
      %c0_34 = arith.constant 0 : index
      %86 = vector.load %arg10[%c0_33, %c0_34] : memref<8x1xf32, #tpu.memory_space<vmem>>, vector<8x1xf32>
      tpu.vector_store %arg10[%c0_33, %c0_34], %85 {strides = array<i32>} : memref<8x1xf32, #tpu.memory_space<vmem>>, vector<8x1xf32>,
    } else {
    }
    %c0 = arith.constant 0 : index
    %c0_1 = arith.constant 0 : index
    %3 = vector.load %arg2[%c0, %c0_1] : memref<8x10xf32, #tpu.memory_space<vmem>>, vector<8x10xf32>
    %c0_2 = arith.constant 0 : index
    %c0_3 = arith.constant 0 : index
    %4 = vector.load %arg3[%c0_2, %c0_3] : memref<8x1xi32, #tpu.memory_space<vmem>>, vector<8x1xi32>
    %c0_4 = arith.constant 0 : index
    %5 = memref.load %arg7[%c0_4] : memref<1xi32, #tpu.memory_space<smem>>
    %c1_i32 = arith.constant 1 : i32
    %6 = arith.muli %arg0, %c1_i32 : i32
    %7 = arith.addi %6, %arg1 : i32
    %c8_i32 = arith.constant 8 : i32
    %8 = arith.muli %7, %c8_i32 : i32
    %9 = tpu.iota {dimensions = array<i32: 0>} : vector<8x1xi32>
    %10 = vector.broadcast %8 : i32 to vector<8x1xi32>
    %11 = arith.addi %10, %9 : vector<8x1xi32>
    %12 = vector.broadcast %5 : i32 to vector<8x1xi32>
    %13 = arith.cmpi slt, %11, %12 : vector<8x1xi32>
    %14 = tpu.iota {dimensions = array<i32: 1>} : vector<8x10xi32>
    %cst = arith.constant dense<0xFF800000> : vector<8xf32>
    %15 = vector.multi_reduction <maximumf>, %3, %cst [1] : vector<8x10xf32> to vector<8xf32>
    %16 = vector.shape_cast %15 : vector<8xf32> to vector<8x1xf32>
    %17 = vector.broadcast %16 : vector<8x1xf32> to vector<8x10xf32>
    %18 = arith.subf %3, %17 : vector<8x10xf32>
    %19 = math.exp %18 : vector<8x10xf32>
    %cst_5 = arith.constant dense<0.000000e+00> : vector<8xf32>
    %20 = vector.multi_reduction <add>, %19, %cst_5 [1] : vector<8x10xf32> to vector<8xf32>
    %21 = vector.shape_cast %20 : vector<8xf32> to vector<8x1xf32>
    %22 = math.log %21 : vector<8x1xf32>
    %23 = arith.addf %22, %16 : vector<8x1xf32>
    %24 = vector.broadcast %4 : vector<8x1xi32> to vector<8x10xi32>
    %25 = arith.cmpi eq, %14, %24 : vector<8x10xi32>
    %cst_6 = arith.constant 0.000000e+00 : f32
    %26 = vector.broadcast %cst_6 : f32 to vector<8x10xf32>
    %27 = arith.select %25, %3, %26 : vector<8x10xi1>, vector<8x10xf32>
    %cst_7 = arith.constant dense<0.000000e+00> : vector<8xf32>
    %28 = vector.multi_reduction <add>, %27, %cst_7 [1] : vector<8x10xf32> to vector<8xf32>
    %29 = vector.shape_cast %28 : vector<8xf32> to vector<8x1xf32>
    %30 = arith.subf %23, %29 : vector<8x1xf32>
    %c0_8 = arith.constant 0 : index
    %c0_9 = arith.constant 0 : index
    %31 = vector.load %arg4[%c0_8, %c0_9] : memref<8x32xf32, #tpu.memory_space<vmem>>, vector<8x32xf32>
    %c0_10 = arith.constant 0 : index
    %c0_11 = arith.constant 0 : index
    %32 = vector.load %arg5[%c0_10, %c0_11] : memref<8x32xf32, #tpu.memory_space<vmem>>, vector<8x32xf32>
    %c0_12 = arith.constant 0 : index
    %c0_13 = arith.constant 0 : index
    %33 = vector.load %arg6[%c0_12, %c0_13] : memref<8x32xf32, #tpu.memory_space<vmem>>, vector<8x32xf32>
    %34 = arith.mulf %31, %31 : vector<8x32xf32>
    %cst_14 = arith.constant dense<0.000000e+00> : vector<8xf32>
    %35 = vector.multi_reduction <add>, %34, %cst_14 [1] : vector<8x32xf32> to vector<8xf32>
    %36 = vector.shape_cast %35 : vector<8xf32> to vector<8x1xf32>
    %37 = arith.mulf %32, %32 : vector<8x32xf32>
    %cst_15 = arith.constant dense<0.000000e+00> : vector<8xf32>
    %38 = vector.multi_reduction <add>, %37, %cst_15 [1] : vector<8x32xf32> to vector<8xf32>
    %39 = vector.shape_cast %38 : vector<8xf32> to vector<8x1xf32>
    %40 = arith.mulf %33, %33 : vector<8x32xf32>
    %cst_16 = arith.constant dense<0.000000e+00> : vector<8xf32>
    %41 = vector.multi_reduction <add>, %40, %cst_16 [1] : vector<8x32xf32> to vector<8xf32>
    %42 = vector.shape_cast %41 : vector<8xf32> to vector<8x1xf32>
    %43 = arith.mulf %31, %32 : vector<8x32xf32>
    %cst_17 = arith.constant dense<0.000000e+00> : vector<8xf32>
    %44 = vector.multi_reduction <add>, %43, %cst_17 [1] : vector<8x32xf32> to vector<8xf32>
    %45 = vector.shape_cast %44 : vector<8xf32> to vector<8x1xf32>
    %46 = arith.mulf %31, %33 : vector<8x32xf32>
    %cst_18 = arith.constant dense<0.000000e+00> : vector<8xf32>
    %47 = vector.multi_reduction <add>, %46, %cst_18 [1] : vector<8x32xf32> to vector<8xf32>
    %48 = vector.shape_cast %47 : vector<8xf32> to vector<8x1xf32>
    %49 = arith.mulf %36, %39 : vector<8x1xf32>
    %cst_19 = arith.constant 1.000000e-16 : f32
    %50 = vector.broadcast %cst_19 : f32 to vector<8x1xf32>
    %51 = arith.maximumf %49, %50 : vector<8x1xf32>
    %52 = math.rsqrt %51 : vector<8x1xf32>
    %53 = arith.mulf %45, %52 : vector<8x1xf32>
    %54 = arith.mulf %36, %42 : vector<8x1xf32>
    %cst_20 = arith.constant 1.000000e-16 : f32
    %55 = vector.broadcast %cst_20 : f32 to vector<8x1xf32>
    %56 = arith.maximumf %54, %55 : vector<8x1xf32>
    %57 = math.rsqrt %56 : vector<8x1xf32>
    %58 = arith.mulf %48, %57 : vector<8x1xf32>
    %c0_21 = arith.constant 0 : index
    %59 = memref.load %arg8[%c0_21] : memref<2xf32, #tpu.memory_space<smem>>
    %c1 = arith.constant 1 : index
    %60 = memref.load %arg8[%c1] : memref<2xf32, #tpu.memory_space<smem>>
    %61 = arith.subf %58, %53 : vector<8x1xf32>
    %62 = vector.broadcast %59 : f32 to vector<8x1xf32>
    %63 = arith.mulf %61, %62 : vector<8x1xf32>
    %cst_22 = arith.constant 0.000000e+00 : f32
    %64 = vector.broadcast %cst_22 : f32 to vector<8x1xf32>
    %65 = arith.maximumf %63, %64 : vector<8x1xf32>
    %66 = math.absf %63 : vector<8x1xf32>
    %cst_23 = arith.constant 0.000000e+00 : f32
    %67 = vector.broadcast %cst_23 : f32 to vector<8x1xf32>
    %68 = arith.subf %67, %66 : vector<8x1xf32>
    %69 = math.exp %68 : vector<8x1xf32>
    %cst_24 = arith.constant 1.000000e+00 : f32
    %70 = vector.broadcast %cst_24 : f32 to vector<8x1xf32>
    %71 = arith.addf %70, %69 : vector<8x1xf32>
    %72 = math.log %71 : vector<8x1xf32>
    %73 = arith.addf %65, %72 : vector<8x1xf32>
    %c0_25 = arith.constant 0 : index
    %c0_26 = arith.constant 0 : index
    %74 = vector.load %arg10[%c0_25, %c0_26] : memref<8x1xf32, #tpu.memory_space<vmem>>, vector<8x1xf32>
    %75 = vector.broadcast %60 : f32 to vector<8x1xf32>
    %76 = arith.mulf %75, %73 : vector<8x1xf32>
    %77 = arith.addf %30, %76 : vector<8x1xf32>
    %cst_27 = arith.constant 0.000000e+00 : f32
    %78 = vector.broadcast %cst_27 : f32 to vector<8x1xf32>
    %79 = arith.select %13, %77, %78 : vector<8x1xi1>, vector<8x1xf32>
    %80 = arith.addf %74, %79 : vector<8x1xf32>
    %c0_28 = arith.constant 0 : index
    %c0_29 = arith.constant 0 : index
    %81 = vector.load %arg10[%c0_28, %c0_29] : memref<8x1xf32, #tpu.memory_space<vmem>>, vector<8x1xf32>
    tpu.vector_store %arg10[%c0_28, %c0_29], %80 {strides = array<i32>} : memref<8x1xf32, #tpu.memory_space<vmem>>, vector<8x1xf32>,
    %c0_i32_30 = arith.constant 0 : i32
    %82 = arith.cmpi eq, %arg1, %c0_i32_30 : i32
    %83 = arith.extui %82 : i1 to i32
    %c0_i32_31 = arith.constant 0 : i32
    %84 = arith.cmpi ne, %83, %c0_i32_31 : i32
    scf.if %84 {
      %c0_32 = arith.constant 0 : index
      %c0_33 = arith.constant 0 : index
      %85 = vector.load %arg10[%c0_32, %c0_33] : memref<8x1xf32, #tpu.memory_space<vmem>>, vector<8x1xf32>
      %86 = vector.shape_cast %85 : vector<8x1xf32> to vector<1x8x1xf32>
      %cst_34 = arith.constant dense<0.000000e+00> : vector<1xf32>
      %87 = vector.multi_reduction <add>, %86, %cst_34 [1, 2] : vector<1x8x1xf32> to vector<1xf32>
      %88 = vector.shape_cast %87 : vector<1xf32> to vector<1x1x1xf32>
      %89 = vector.extract %88[0, 0, 0] : f32 from vector<1x1x1xf32>
      %90 = vector.broadcast %89 : f32 to vector<1x1x1xf32>
      %c0_35 = arith.constant 0 : index
      %c0_36 = arith.constant 0 : index
      %c0_37 = arith.constant 0 : index
      %91 = vector.load %arg9[%c0_35, %c0_36, %c0_37] : memref<1x1x1xf32, #tpu.memory_space<vmem>>, vector<1x1x1xf32>
      tpu.vector_store %arg9[%c0_35, %c0_36, %c0_37], %90 {strides = array<i32>} : memref<1x1x1xf32, #tpu.memory_space<vmem>>, vector<1x1x1xf32>,
    } else {
    }
    return
  }
  func.func @transform_0(%arg0: i32, %arg1: i32) -> (i32, i32) {
    %c1_i32 = arith.constant 1 : i32
    %0 = arith.muli %arg0, %c1_i32 : i32
    %1 = arith.addi %0, %arg1 : i32
    %c0_i32 = arith.constant 0 : i32
    %2 = arith.minsi %1, %c0_i32 : i32
    %c0_i32_0 = arith.constant 0 : i32
    %c0_i32_1 = arith.constant 0 : i32
    return %2, %c0_i32_0 : i32, i32
  }
  func.func @transform_1(%arg0: i32, %arg1: i32) -> (i32, i32) {
    %c1_i32 = arith.constant 1 : i32
    %0 = arith.muli %arg0, %c1_i32 : i32
    %1 = arith.addi %0, %arg1 : i32
    %c0_i32 = arith.constant 0 : i32
    %2 = arith.minsi %1, %c0_i32 : i32
    %c0_i32_0 = arith.constant 0 : i32
    %c0_i32_1 = arith.constant 0 : i32
    return %2, %c0_i32_0 : i32, i32
  }
  func.func @transform_2(%arg0: i32, %arg1: i32) -> (i32, i32) {
    %c1_i32 = arith.constant 1 : i32
    %0 = arith.muli %arg0, %c1_i32 : i32
    %1 = arith.addi %0, %arg1 : i32
    %c0_i32 = arith.constant 0 : i32
    %2 = arith.minsi %1, %c0_i32 : i32
    %c0_i32_0 = arith.constant 0 : i32
    %c0_i32_1 = arith.constant 0 : i32
    return %2, %c0_i32_0 : i32, i32
  }
  func.func @transform_3(%arg0: i32, %arg1: i32) -> (i32, i32) {
    %c1_i32 = arith.constant 1 : i32
    %0 = arith.muli %arg0, %c1_i32 : i32
    %1 = arith.addi %0, %arg1 : i32
    %c0_i32 = arith.constant 0 : i32
    %2 = arith.minsi %1, %c0_i32 : i32
    %c0_i32_0 = arith.constant 0 : i32
    %c0_i32_1 = arith.constant 0 : i32
    return %2, %c0_i32_0 : i32, i32
  }
  func.func @transform_4(%arg0: i32, %arg1: i32) -> (i32, i32) {
    %c1_i32 = arith.constant 1 : i32
    %0 = arith.muli %arg0, %c1_i32 : i32
    %1 = arith.addi %0, %arg1 : i32
    %c0_i32 = arith.constant 0 : i32
    %2 = arith.minsi %1, %c0_i32 : i32
    %c0_i32_0 = arith.constant 0 : i32
    %c0_i32_1 = arith.constant 0 : i32
    return %2, %c0_i32_0 : i32, i32
  }
  func.func @transform_5(%arg0: i32, %arg1: i32) -> i32 {
    %c0_i32 = arith.constant 0 : i32
    %c0_i32_0 = arith.constant 0 : i32
    return %c0_i32 : i32
  }
  func.func @transform_6(%arg0: i32, %arg1: i32) -> i32 {
    %c0_i32 = arith.constant 0 : i32
    %c0_i32_0 = arith.constant 0 : i32
    return %c0_i32 : i32
  }
  func.func @transform_7(%arg0: i32, %arg1: i32) -> (i32, i32, i32) {
    %c0_i32 = arith.constant 0 : i32
    %c0_i32_0 = arith.constant 0 : i32
    %c0_i32_1 = arith.constant 0 : i32
    return %arg0, %c0_i32, %c0_i32_0 : i32, i32, i32
  }
}

</mosaic_0001>

<llo_original>
// kernel: tpu_custom_call.1
$region0: #{tpu_custom_call.1}
  #allocation0 [shape = 'u32[]', space=smem, size = 0x4, offset = 0x4, fixed_abs, tag = 'smem constant byte address 0x4 - core index']
  #allocation1 [shape = 'u32[144,128]{1,0:T(1,128)}', space=vmem, size = 0x12000, scoped, tag = 'internal scratch']
  #allocation2 [shape = 'f32[8,1]{1,0:T(8,128)}', space=vmem, size = 0x1000, scoped, tag = 'scratch operand']
  #allocation3 [shape = 's32[1]{0:T(128)S(6)}', space=smem, size = 0x200, scoped, tag = 'scoped memory for tpu_custom_call.1']
  %s0 = inlined_call_operand.vmem [shape: f32[8,10], index: 0, kind: input, shape index: {}]
  %s1 = inlined_call_operand.vmem [shape: s32[8,1], index: 1, kind: input, shape index: {}]
  %s2 = inlined_call_operand.hbm [shape: f32[8,32], index: 2, kind: input, shape index: {}]
  %s3 = inlined_call_operand.vmem [shape: f32[8,32], index: 3, kind: input, shape index: {}]
  %s4 = inlined_call_operand.hbm [shape: f32[8,32], index: 4, kind: input, shape index: {}]
  %s5 = inlined_call_operand.<no memory space> [shape: s32[1], index: 5, kind: input, shape index: {}]
  %s6 = inlined_call_operand.vmem [shape: f32[2], index: 6, kind: input, shape index: {}]
  %s7 = inlined_call_operand.hbm [shape: f32[1,1,1], index: 7, kind: output, shape index: {}]
  %s8 = sld [smem:[#allocation0]]
  $region58: #{tpu_custom_call.1} parent=0
    _
  %s10 = ssub.s32 1, %s8
  %s11 = scalar_select 0, %s10, %s8
  %12 = sst [smem:[#allocation3]] %s5
  $region1: #{tpu_custom_call.1} parent=0
    #allocation4 [shape = 'u8[4096]{0}', space=vmem, size = 0x1000, scoped, tag = 'input window, operand 2, single buffered']
    #allocation5 [shape = 's32[1]{0}', space=sflag, size = 0x4, scoped, tag = 'scoped memory for tpu_custom_call.1']
    #allocation6 [shape = 's32[1]{0}', space=sflag, size = 0x4, scoped, tag = 'scoped memory for tpu_custom_call.1']
    #allocation7 [shape = 's32[1]{0}', space=sflag, size = 0x4, scoped, tag = 'scoped memory for tpu_custom_call.1']
    #allocation8 [shape = 'u8[4096]{0}', space=vmem, size = 0x1000, scoped, tag = 'input window, operand 4, single buffered']
    #allocation9 [shape = 's32[1]{0}', space=sflag, size = 0x4, scoped, tag = 'scoped memory for tpu_custom_call.1']
    #allocation10 [shape = 'u8[512]{0}', space=smem, size = 0x200, scoped, tag = 'input window, operand 6, single buffered']
    #allocation11 [shape = 'u8[512]{0}', space=vmem, size = 0x400, scoped, tag = 'output window, operand 0, single buffered']
    %13 = vsyncpa [#allocation5], 0
    %14 = vsyncpa [#allocation9], 0
    %15 = vsyncpa [#allocation7], 0
    %16 = vsyncpa [#allocation6], 0
    // Predicated region
    $region2: #{tpu_custom_call.1} parent=1 // pred_check
      _
    $region3: #{tpu_custom_call.1} parent=1 // pred_check_branch
      %18 = sbr.rel (0) target = $region5
    $region4: #{tpu_custom_call.1} parent=1 // pred_region
      %s19 = sadd.s32 0, 0
      %p20 = scmp.lt.s32.totalorder %s19, 0
      %s21 = scalar_select %p20, %s19, 0
      %p22 = scmp.lt.s32.totalorder %s21, 0
      %s23 = scalar_select %p22, %s21, 0
      %s24 = smul.addr %s23, 8
      %s25 = scalar_lea.vmem %s0, %s24
      %s26 = sadd.s32 0, 0
      %p27 = scmp.lt.s32.totalorder %s26, 0
      %s28 = scalar_select %p27, %s26, 0
    $region5: #{tpu_custom_call.1} parent=1 // pred_fallthru
      _
    // Predicated region
    $region6: #{tpu_custom_call.1} parent=1 // pred_check
      _
    $region7: #{tpu_custom_call.1} parent=1 // pred_check_branch
      %30 = sbr.rel (0) target = $region9
    $region8: #{tpu_custom_call.1} parent=1 // pred_region
      %s31 = sadd.s32 0, 0
      %p32 = scmp.lt.s32.totalorder %s31, 0
      %s33 = scalar_select %p32, %s31, 0
      %p34 = scmp.lt.s32.totalorder %s33, 0
      %s35 = scalar_select %p34, %s33, 0
      %s36 = smul.addr %s35, 8
      %s37 = scalar_lea.vmem %s1, %s36
      %s38 = sadd.s32 0, 0
      %p39 = scmp.lt.s32.totalorder %s38, 0
      %s40 = scalar_select %p39, %s38, 0
    $region9: #{tpu_custom_call.1} parent=1 // pred_fallthru
      _
    // Predicated region
    $region10: #{tpu_custom_call.1} parent=1 // pred_check
      _
    $region11: #{tpu_custom_call.1} parent=1 // pred_check_branch
      %42 = sbr.rel (0) target = $region13
    $region12: #{tpu_custom_call.1} parent=1 // pred_region
      %s43 = sadd.s32 0, 0
      %p44 = scmp.lt.s32.totalorder %s43, 0
      %s45 = scalar_select %p44, %s43, 0
      %s47 = ssub.s32 128, 128
      %48 = vsyncadd [#allocation5], %s47
      %s49 = smul.addr %s45, 128
      %s50 = scalar_lea.hbm %s2, %s49
      %s52 = sshll.u32 [#allocation4], 4
      %s53 = int_to_ptr.vmem [resolvable:$true] %s52
      %55 = dma.hbm_to_vmem [thread:$0]  %s50, 128, %s53, [#allocation5]
    $region13: #{tpu_custom_call.1} parent=1 // pred_fallthru
      _
    // Predicated region
    $region14: #{tpu_custom_call.1} parent=1 // pred_check
      _
    $region15: #{tpu_custom_call.1} parent=1 // pred_check_branch
      %57 = sbr.rel (0) target = $region17
    $region16: #{tpu_custom_call.1} parent=1 // pred_region
      %s58 = sadd.s32 0, 0
      %p59 = scmp.lt.s32.totalorder %s58, 0
      %s60 = scalar_select %p59, %s58, 0
      %p61 = scmp.lt.s32.totalorder %s60, 0
      %s62 = scalar_select %p61, %s60, 0
      %s63 = smul.addr %s62, 8
      %s64 = scalar_lea.vmem %s3, %s63
      %s65 = sadd.s32 0, 0
      %p66 = scmp.lt.s32.totalorder %s65, 0
      %s67 = scalar_select %p66, %s65, 0
    $region17: #{tpu_custom_call.1} parent=1 // pred_fallthru
      _
    // Predicated region
    $region18: #{tpu_custom_call.1} parent=1 // pred_check
      _
    $region19: #{tpu_custom_call.1} parent=1 // pred_check_branch
      %69 = sbr.rel (0) target = $region21
    $region20: #{tpu_custom_call.1} parent=1 // pred_region
      %s70 = sadd.s32 0, 0
      %p71 = scmp.lt.s32.totalorder %s70, 0
      %s72 = scalar_select %p71, %s70, 0
      %s74 = ssub.s32 128, 128
      %75 = vsyncadd [#allocation9], %s74
      %s76 = smul.addr %s72, 128
      %s77 = scalar_lea.hbm %s4, %s76
      %s79 = sshll.u32 [#allocation8], 4
      %s80 = int_to_ptr.vmem [resolvable:$true] %s79
      %82 = dma.hbm_to_vmem [thread:$0]  %s77, 128, %s80, [#allocation9]
    $region21: #{tpu_custom_call.1} parent=1 // pred_fallthru
      _
    // Predicated region
    $region22: #{tpu_custom_call.1} parent=1 // pred_check
      _
    $region23: #{tpu_custom_call.1} parent=1 // pred_check_branch
      %84 = sbr.rel (0) target = $region25
    $region24: #{tpu_custom_call.1} parent=1 // pred_region
      _
    $region25: #{tpu_custom_call.1} parent=1 // pred_fallthru
      _
    // Predicated region
    $region26: #{tpu_custom_call.1} parent=1 // pred_check
      _
    $region27: #{tpu_custom_call.1} parent=1 // pred_check_branch
      %86 = sbr.rel (0) target = $region29
    $region28: #{tpu_custom_call.1} parent=1 // pred_region
      %s88 = ssub.s32 16, 16
      %89 = vsyncadd [#allocation7], %s88
      %s91 = sshll.u32 %s6, 4
      %s92 = int_to_ptr.vmem [resolvable:$true] %s91
      %94 = dma.vmem_to_smem %s92, 16, [#allocation10], [#allocation7]
    $region29: #{tpu_custom_call.1} parent=1 // pred_fallthru
      _
    // Predicated region
    $region30: #{tpu_custom_call.1} parent=1 // pred_check
      _
    $region31: #{tpu_custom_call.1} parent=1 // pred_check_branch
      %96 = sbr.rel (0) target = $region33
    $region32: #{tpu_custom_call.1} parent=1 // pred_region
      %97 = dma.done [#allocation5], 128
    $region33: #{tpu_custom_call.1} parent=1 // pred_fallthru
      _
    // Predicated region
    $region34: #{tpu_custom_call.1} parent=1 // pred_check
      _
    $region35: #{tpu_custom_call.1} parent=1 // pred_check_branch
      %99 = sbr.rel (0) target = $region37
    $region36: #{tpu_custom_call.1} parent=1 // pred_region
      %100 = dma.done [#allocation9], 128
    $region37: #{tpu_custom_call.1} parent=1 // pred_fallthru
      _
    // Predicated region
    $region38: #{tpu_custom_call.1} parent=1 // pred_check
      _
    $region39: #{tpu_custom_call.1} parent=1 // pred_check_branch
      %102 = sbr.rel (0) target = $region41
    $region40: #{tpu_custom_call.1} parent=1 // pred_region
      %103 = dma.done [#allocation7], 16
    $region41: #{tpu_custom_call.1} parent=1 // pred_fallthru
      _
    %104 = sfence
    %s105 = sadd.s32 0, 0
    %p106 = scmp.lt.s32.totalorder %s105, 0
    %s107 = scalar_select %p106, %s105, 0
    %p108 = scmp.lt.s32.totalorder %s107, 0
    %s109 = scalar_select %p108, %s107, 0
    %s110 = smul.addr %s109, 8
    %s111 = scalar_lea.vmem %s0, %s110
    %s112 = sadd.s32 0, 0
    %p113 = scmp.lt.s32.totalorder %s112, 0
    %s114 = scalar_select %p113, %s112, 0
    %p115 = scmp.lt.s32.totalorder %s114, 0
    %s116 = scalar_select %p115, %s114, 0
    %s117 = smul.addr %s116, 8
    %s118 = scalar_lea.vmem %s1, %s117
    %s119 = sadd.s32 0, 0
    %p120 = scmp.lt.s32.totalorder %s119, 0
    %s121 = scalar_select %p120, %s119, 0
    %p122 = scmp.lt.s32.totalorder %s121, 0
    %s123 = scalar_select %p122, %s121, 0
    %s124 = smul.addr %s123, 8
    %s125 = scalar_lea.vmem %s3, %s124
    %s126 = sadd.s32 0, 0
    %p127 = scmp.lt.s32.totalorder %s126, 0
    %s128 = scalar_select %p127, %s126, 0
    %p129 = scmp.lt.s32.totalorder %s128, 0
    %s130 = scalar_select %p129, %s128, 0
    %s131 = smul.addr %s130, 8
    %s132 = scalar_lea.vmem %s0, %s131
    %s133 = sadd.s32 0, 0
    %p134 = scmp.lt.s32.totalorder %s133, 0
    %s135 = scalar_select %p134, %s133, 0
    %s136 = sadd.s32 0, 0
    %p137 = scmp.lt.s32.totalorder %s136, 0
    %s138 = scalar_select %p137, %s136, 0
    %p139 = scmp.lt.s32.totalorder %s138, 0
    %s140 = scalar_select %p139, %s138, 0
    %s141 = smul.addr %s140, 8
    %s142 = scalar_lea.vmem %s1, %s141
    %s143 = sadd.s32 0, 0
    %p144 = scmp.lt.s32.totalorder %s143, 0
    %s145 = scalar_select %p144, %s143, 0
    %s146 = sadd.s32 0, 0
    %p147 = scmp.lt.s32.totalorder %s146, 0
    %s148 = scalar_select %p147, %s146, 0
    %s149 = sadd.s32 0, 0
    %p150 = scmp.lt.s32.totalorder %s149, 0
    %s151 = scalar_select %p150, %s149, 0
    %p152 = scmp.lt.s32.totalorder %s151, 0
    %s153 = scalar_select %p152, %s151, 0
    %s154 = smul.addr %s153, 8
    %s155 = scalar_lea.vmem %s3, %s154
    %s156 = sadd.s32 0, 0
    %p157 = scmp.lt.s32.totalorder %s156, 0
    %s158 = scalar_select %p157, %s156, 0
    %s159 = sadd.s32 0, 0
    %p160 = scmp.lt.s32.totalorder %s159, 0
    %s161 = scalar_select %p160, %s159, 0
    %p162 = scmp.eq.s32.totalorder 0, 0
    // Predicated region
    $region42: #{tpu_custom_call.1} parent=1 // pred_check
      %p163 = pneg %p162
    $region43: #{tpu_custom_call.1} parent=1 // pred_check_branch
      %165 = sbr.rel (%p163) target = $region45
    $region44: #{tpu_custom_call.1} parent=1 // pred_region
      %vm166 = vcmask 7168
      %167 = vst.msk [vmem:[#allocation2] sm:$0xff] %vm166, 0.0
    $region45: #{tpu_custom_call.1} parent=1 // pred_fallthru
      _
    %v168 = vld [vmem:[%s132] sm:$0xff]
    %v169 = vld [vmem:[%s142] sm:$0xff]
    %s170 = sld [smem:[#allocation3]]
    %s171 = sadd.s32 0, 0
    %s172 = smul.u32 %s171, 8
    %v173 = vlaneseq
    %v174 = vshrl.u32 %v173, 7
    %v175 = vstv %s172
    %v176 = vadd.s32 %v175, %v174
    %v177 = vstv %s170
    %vm178 = vcmp.lt.s32.totalorder %v176, %v177
    %v179 = vlaneseq
    %v180 = vand.u32 %v179, 127
    %vm181 = vcmask 80896
    %v182 = vsel %vm181, %v168, -inf
    %183 = vmax.xlane.f32.xlu0 %v182
    %v184 = vpop.xlane.xlu0 %183
    %v185 = vsub.f32 %v168, %v184
    %v186 = vmul.f32 %v185, 1.442695
    %v187 = vpow.pop %v186
    %v188 = vsel %vm181, %v187, 0.0
    %189 = vadd.xlane.f32.xlu0 %v188
    %v190 = vpop.xlane.xlu0 %189
    %v191 = vlog2.pop %v190
    %v192 = vmul.f32 %v191, 0.6931472
    %v193 = vadd.f32 %v192, %v184
    %194 = vset.pattern.permute.xlu0 0
    %195 = vperm.xlu0 %194, %v169
    %v196 = vpop.permute.xlu0 %195
    %vm197 = vcmp.eq.s32.totalorder %v180, %v196
    %v198 = vsel %vm197, %v168, 0.0
    %v199 = vsel %vm181, %v198, 0.0
    %200 = vadd.xlane.f32.xlu0 %v199
    %v201 = vpop.xlane.xlu0 %200
    %v202 = vsub.f32 %v193, %v201
    %v203 = vld [vmem:[#allocation4] sm:$0xff]
    %v204 = vld [vmem:[%s155] sm:$0xff]
    %v205 = vld [vmem:[#allocation8] sm:$0xff]
    %v206 = vmul.f32 %v203, %v203
    %vm207 = vcmask 261120
    %v208 = vsel %vm207, %v206, 0.0
    %209 = vadd.xlane.f32.xlu0 %v208
    %v210 = vpop.xlane.xlu0 %209
    %v211 = vmul.f32 %v204, %v204
    %v212 = vsel %vm207, %v211, 0.0
    %213 = vadd.xlane.f32.xlu0 %v212
    %v214 = vpop.xlane.xlu0 %213
    %v215 = vmul.f32 %v205, %v205
    %v216 = vsel %vm207, %v215, 0.0
    %217 = vadd.xlane.f32.xlu0 %v216
    %v218 = vpop.xlane.xlu0 %217
    %v219 = vmul.f32 %v203, %v204
    %v220 = vsel %vm207, %v219, 0.0
    %221 = vadd.xlane.f32.xlu0 %v220
    %v222 = vpop.xlane.xlu0 %221
    %v223 = vmul.f32 %v203, %v205
    %v224 = vsel %vm207, %v223, 0.0
    %225 = vadd.xlane.f32.xlu0 %v224
    %v226 = vpop.xlane.xlu0 %225
    %v227 = vmul.f32 %v210, %v214
    %v228 = vmax.f32 %v227, 1e-16
    %v229 = vrsqrt.pop %v228
    %v230 = vmul.f32 %v222, %v229
    %v231 = vmul.f32 %v210, %v218
    %v232 = vmax.f32 %v231, 1e-16
    %v233 = vrsqrt.pop %v232
    %v234 = vmul.f32 %v226, %v233
    %s235 = sld [smem:[#allocation10]]
    %s236 = sld [smem:[#allocation10 + $0x1]]
    %v237 = vsub.f32 %v234, %v230
    %v238 = vstv %s235
    %v239 = vmul.f32 %v237, %v238
    %v240 = vmax.f32 %v239, 0.0
    %v241 = vand.u32 2147483647, %v239
    %v242 = vsub.f32 0.0, %v241
    %v243 = vmul.f32 %v242, 1.442695
    %v244 = vpow.pop %v243
    %v245 = vadd.f32 %v244, 1.0
    %v246 = vlog2.pop %v245
    %v247 = vmul.f32 %v246, 0.6931472
    %v248 = vadd.f32 %v240, %v247
    %v249 = vld [vmem:[#allocation2] sm:$0xff]
    %v250 = vstv %s236
    %v251 = vmul.f32 %v250, %v248
    %v252 = vadd.f32 %v202, %v251
    %v253 = vsel %vm178, %v252, 0.0
    %v254 = vadd.f32 %v249, %v253
    %vm255 = vcmask 7168
    %256 = vst.msk [vmem:[#allocation2] sm:$0xff] %vm255, %v254
    // Predicated region
    $region46: #{tpu_custom_call.1} parent=1 // pred_check
      %p257 = pneg %p162
    $region47: #{tpu_custom_call.1} parent=1 // pred_check_branch
      %259 = sbr.rel (%p257) target = $region49
    $region48: #{tpu_custom_call.1} parent=1 // pred_region
      %v260 = vld [vmem:[#allocation2] sm:$0xff]
      %v261 = vsel %vm255, %v260, 0.0
      %262 = vadd.xlane.f32.xlu0 %v261
      %v263 = vpop.xlane.xlu0 %262
      %v264 = vrot.slane %v263, 4
      %v265 = vadd.f32 %v263, %v264
      %v266 = vrot.slane %v265, 2
      %v267 = vadd.f32 %v265, %v266
      %v268 = vrot.slane %v267, 1
      %v269 = vadd.f32 %v267, %v268
      %s270 = vtos %v269
      %v271 = vstv %s270
      %vm272 = vcmask 0
      %273 = vst.msk [vmem:[#allocation11] sm:$0x1] %vm272, %v271
    $region49: #{tpu_custom_call.1} parent=1 // pred_fallthru
      _
    // Predicated region
    $region50: #{tpu_custom_call.1} parent=1 // pred_check
      _
    $region51: #{tpu_custom_call.1} parent=1 // pred_check_branch
      %275 = sbr.rel (0) target = $region53
    $region52: #{tpu_custom_call.1} parent=1 // pred_region
      %s277 = ssub.s32 16, 16
      %278 = vsyncadd [#allocation6], %s277
      %s280 = sshll.u32 [#allocation11], 4
      %s281 = int_to_ptr.vmem [resolvable:$true] %s280
      %283 = dma.vmem_to_hbm [thread:$0]  %s281, 16, %s7, [#allocation6]
    $region53: #{tpu_custom_call.1} parent=1 // pred_fallthru
      _
    // Predicated region
    $region54: #{tpu_custom_call.1} parent=1 // pred_check
      _
    $region55: #{tpu_custom_call.1} parent=1 // pred_check_branch
      %285 = sbr.rel (0) target = $region57
    $region56: #{tpu_custom_call.1} parent=1 // pred_region
      %286 = dma.done [#allocation6], 16
    $region57: #{tpu_custom_call.1} parent=1 // pred_fallthru
      _
    %287 = vsyncpa [#allocation5], 1
    %288 = vsyncpa [#allocation9], 1
    %289 = vsyncpa [#allocation6], 1
    %290 = vsyncpa [#allocation7], 1

</llo_original>
